<compile_context>
chip_gen: v7x
topology: tpu7x:2x2x1
jax: 0.10.0
libtpu: 0.0.40
codegen_flags: <defaults>
</compile_context>

<pallas_src>
import functools
import math

import jax
import jax.numpy as jnp
from jax.experimental import pallas as pl
from jax.experimental.pallas import tpu as pltpu


def _round_up(x, m):
    return ((x + m - 1) // m) * m


def _row_tiles(M, max_tile=512):
    """Pick a row tile that divides M (pref 512/256/128); else pad minimally."""
    for t in (max_tile, 256, 128):
        if M >= t and M % t == 0:
            return t, M
    if M <= max_tile:
        Mp = _round_up(M, 8)
        return Mp, Mp
    Mp = _round_up(M, 128)
    return 128, Mp


def _lane_tiles(L, max_tile=512):
    """Pick a lane tile for the conv GEMM (H*W) axis."""
    for t in (max_tile, 256, 128):
        if L >= t and L % t == 0:
            return t, L
    if L <= 1024:
        return L, L          # full-extent block is always legal
    Lp = _round_up(L, 128)
    return 128, Lp


def _apply_act(x, act):
    if act == "relu":
        return jnp.maximum(x, 0.0)
    if act == "sigmoid":
        return jax.nn.sigmoid(x)
    return x


_PAR1 = pltpu.CompilerParams(dimension_semantics=("parallel",))
_PAR2 = pltpu.CompilerParams(dimension_semantics=("parallel", "parallel"))


# ---------------------------------------------------------------------------
# Pallas kernels
# ---------------------------------------------------------------------------
def _conv_kernel(p_ref, w_ref, b_ref, o_ref, *, act):
    # p: (1, K, TN) im2col patches, w: (Cout, K) bf16, out: (1, Cout, TN)
    p = p_ref[0].astype(jnp.bfloat16)
    acc = jnp.dot(w_ref[...], p, preferred_element_type=jnp.float32)
    acc = acc + b_ref[...]
    o_ref[0] = _apply_act(acc, act)


def _ln_rows(x, g, b):
    mu = jnp.mean(x, axis=-1, keepdims=True)
    xc = x - mu
    var = jnp.mean(xc * xc, axis=-1, keepdims=True)
    inv = jax.lax.rsqrt(var + 1e-5)
    return xc * inv * g + b


def _ln_qkv_kernel(x_ref, g_ref, be_ref, w1_ref, w2_ref, o_ref):
    # qkv = (LN(x) @ reduce_wT) @ qkv_wT   (both Linears are bias-free)
    xn = _ln_rows(x_ref[...].astype(jnp.float32), g_ref[...], be_ref[...])
    y = jnp.dot(xn.astype(jnp.bfloat16), w1_ref[...],
                preferred_element_type=jnp.float32)
    o_ref[...] = jnp.dot(y.astype(jnp.bfloat16), w2_ref[...],
                         preferred_element_type=jnp.float32)


def _proj_mlp_kernel(o_ref, r_ref, wp_ref, bp_ref, g_ref, be_ref,
                     w1_ref, b1_ref, w2_ref, b2_ref, out_ref):
    # t   = residual + attn_out @ proj_wT + proj_b
    # out = t + relu(LN(t) @ fc1_wT + b1) @ fc2_wT + b2
    t = (jnp.dot(o_ref[...].astype(jnp.bfloat16), wp_ref[...],
                 preferred_element_type=jnp.float32)
         + bp_ref[...] + r_ref[...].astype(jnp.float32))
    tn = _ln_rows(t, g_ref[...], be_ref[...])
    h = jnp.maximum(jnp.dot(tn.astype(jnp.bfloat16), w1_ref[...],
                            preferred_element_type=jnp.float32) + b1_ref[...], 0.0)
    out_ref[...] = t + jnp.dot(h.astype(jnp.bfloat16), w2_ref[...],
                               preferred_element_type=jnp.float32) + b2_ref[...]


def _attn_kernel(q_ref, k_ref, v_ref, o_ref, *, scale):
    q = q_ref[...].astype(jnp.bfloat16)
    k = k_ref[...].astype(jnp.bfloat16)
    v = v_ref[...].astype(jnp.bfloat16)
    s = jnp.einsum("gqd,gkd->gqk", q, k,
                   preferred_element_type=jnp.float32) * scale
    s = s - jnp.max(s, axis=-1, keepdims=True)
    p = jnp.exp(s)
    p = p * pl.reciprocal(jnp.sum(p, axis=-1, keepdims=True), approx=True)
    o_ref[...] = jnp.einsum("gqk,gkd->gqd", p.astype(jnp.bfloat16), v,
                            preferred_element_type=jnp.float32)


# ---------------------------------------------------------------------------
# Pallas wrappers
# ---------------------------------------------------------------------------
@jax.jit
def ln_reduce_qkv(x, gamma, beta, w1T, w2T):
    """qkv = (LayerNorm(x) @ w1T) @ w2T ; fused LN + reduce + qkv (no biases)."""
    M, C = x.shape
    H = w1T.shape[1]
    N = w2T.shape[1]
    TM, Mp = _row_tiles(M)
    xp = x if Mp == M else jnp.pad(x, ((0, Mp - M), (0, 0)))
    out = pl.pallas_call(
        _ln_qkv_kernel,
        out_shape=jax.ShapeDtypeStruct((Mp, N), jnp.float32),
        grid=(Mp // TM,),
        in_specs=[pl.BlockSpec((TM, C), lambda i: (i, 0)),
                  pl.BlockSpec((1, C), lambda i: (0, 0)),
                  pl.BlockSpec((1, C), lambda i: (0, 0)),
                  pl.BlockSpec((C, H), lambda i: (0, 0)),
                  pl.BlockSpec((H, N), lambda i: (0, 0))],
        out_specs=pl.BlockSpec((TM, N), lambda i: (i, 0)),
        compiler_params=_PAR1,
    )(xp, gamma.astype(jnp.float32).reshape(1, C),
      beta.astype(jnp.float32).reshape(1, C),
      w1T.astype(jnp.bfloat16), w2T.astype(jnp.bfloat16))
    return out if Mp == M else out[:M]


@jax.jit
def attn_proj_mlp(o, x_res, proj_wT, proj_b, gamma, beta,
                  fc1_wT, fc1_b, fc2_wT, fc2_b):
    """Fused transformer epilogue:
       t = x_res + o @ proj_wT + proj_b ; out = t + fc2(relu(fc1(LN(t))))."""
    M, C = x_res.shape
    Hd = fc1_wT.shape[1]
    TM, Mp = _row_tiles(M)
    op = o if Mp == M else jnp.pad(o, ((0, Mp - M), (0, 0)))
    rp = x_res if Mp == M else jnp.pad(x_res, ((0, Mp - M), (0, 0)))
    out = pl.pallas_call(
        _proj_mlp_kernel,
        out_shape=jax.ShapeDtypeStruct((Mp, C), jnp.float32),
        grid=(Mp // TM,),
        in_specs=[pl.BlockSpec((TM, C), lambda i: (i, 0)),    # attn out
                  pl.BlockSpec((TM, C), lambda i: (i, 0)),    # residual
                  pl.BlockSpec((C, C), lambda i: (0, 0)),     # proj_wT
                  pl.BlockSpec((1, C), lambda i: (0, 0)),     # proj_b
                  pl.BlockSpec((1, C), lambda i: (0, 0)),     # ln gamma
                  pl.BlockSpec((1, C), lambda i: (0, 0)),     # ln beta
                  pl.BlockSpec((C, Hd), lambda i: (0, 0)),    # fc1_wT
                  pl.BlockSpec((1, Hd), lambda i: (0, 0)),    # fc1_b
                  pl.BlockSpec((Hd, C), lambda i: (0, 0)),    # fc2_wT
                  pl.BlockSpec((1, C), lambda i: (0, 0))],    # fc2_b
        out_specs=pl.BlockSpec((TM, C), lambda i: (i, 0)),
        compiler_params=_PAR1,
    )(op, rp, proj_wT.astype(jnp.bfloat16),
      proj_b.astype(jnp.float32).reshape(1, C),
      gamma.astype(jnp.float32).reshape(1, C),
      beta.astype(jnp.float32).reshape(1, C),
      fc1_wT.astype(jnp.bfloat16), fc1_b.astype(jnp.float32).reshape(1, Hd),
      fc2_wT.astype(jnp.bfloat16), fc2_b.astype(jnp.float32).reshape(1, C))
    return out if Mp == M else out[:M]


def _pick_group_tile(G, S, Dh):
    per_group = 4 * (3 * S * Dh + S * S + S * Dh)   # q,k,v,o + scores (f32)
    cap = max(1, (8 * 1024 * 1024) // max(per_group, 1))
    for cand in (32, 16, 8, 4, 2):
        if cand <= cap and G % cand == 0:
            return cand
    return 1


@functools.partial(jax.jit, static_argnames=("scale",))
def chunked_attention(q, k, v, *, scale):
    """q, k, v: (G, S, Dh).  softmax(q k^T * scale) v per group, Gb groups
    batched per grid step."""
    G, S, Dh = q.shape
    Gb = _pick_group_tile(G, S, Dh)
    # TODO(synk): for very large S (big images, esp. v7x 64 MiB VMEM) switch to
    # a flash-style online-softmax loop over key tiles instead of full SxS.
    return pl.pallas_call(
        functools.partial(_attn_kernel, scale=scale),
        out_shape=jax.ShapeDtypeStruct((G, S, Dh), jnp.float32),
        grid=(G // Gb,),
        in_specs=[pl.BlockSpec((Gb, S, Dh), lambda g: (g, 0, 0))] * 3,
        out_specs=pl.BlockSpec((Gb, S, Dh), lambda g: (g, 0, 0)),
        compiler_params=_PAR1,
    )(q, k, v)


# ---------------------------------------------------------------------------
# im2col / fold glue + conv wrapper (conv matmul goes through the Pallas kernel)
# ---------------------------------------------------------------------------
def unfold_nchw(x, k, pad):
    """torch.nn.Unfold semantics -> (B, C*k*k, H*W), channel-major ordering."""
    B, C, H, W = x.shape
    xp = jnp.pad(x, ((0, 0), (0, 0), (pad, pad), (pad, pad)))
    cols = []
    for ki in range(k):
        for kj in range(k):
            cols.append(xp[:, :, ki:ki + H, kj:kj + W])
    p = jnp.stack(cols, axis=2)              # (B, C, k*k, H, W)
    return p.reshape(B, C * k * k, H * W)


def fold_nchw(patches, h, w, k, pad):
    """torch.nn.Fold semantics (stride=1, dilation=1): overlap-add."""
    # TODO(synk): fold overlap-add is still XLA glue (k*k passes); a fused
    # Pallas scatter-add kernel would cut this HBM traffic further.
    B, Ckk, _ = patches.shape
    C = Ckk // (k * k)
    p = patches.reshape(B, C, k, k, h, w)
    out = jnp.zeros((B, C, h + 2 * pad, w + 2 * pad), patches.dtype)
    for ki in range(k):
        for kj in range(k):
            out = out.at[:, :, ki:ki + h, kj:kj + w].add(p[:, :, ki, kj])
    return out[:, :, pad:pad + h, pad:pad + w]


@functools.partial(jax.jit, static_argnames=("act", "groups"))
def conv2d(x, w, b=None, act="none", groups=1):
    """NCHW conv, padding=k//2, stride 1, lowered to a transposed GEMM
    out[b] = W_flat @ patches[b]  so H*W is the lane-dense last dim."""
    B, Cin, H, W_ = x.shape
    Cout, Cg, k, _ = w.shape
    if groups > 1:
        og = Cout // groups
        outs = []
        for g in range(groups):
            bg = None if b is None else b[g * og:(g + 1) * og]
            outs.append(conv2d(x[:, g * Cg:(g + 1) * Cg], w[g * og:(g + 1) * og],
                               bg, act=act, groups=1))
        return jnp.concatenate(outs, axis=1)
    pad = k // 2
    HW = H * W_
    K = Cg * k * k
    if k == 1:
        patches = x.reshape(B, Cin, HW)                    # no im2col needed
    else:
        # TODO(synk): fuse im2col into the kernel (halo'd spatial tiles) to
        # avoid the k*k HBM expansion of the activations.
        patches = unfold_nchw(x, k, pad).astype(jnp.bfloat16)   # (B, K, HW)
    Wf = w.reshape(Cout, K).astype(jnp.bfloat16)
    bias = jnp.zeros((Cout,), jnp.float32) if b is None else b
    bias = bias.astype(jnp.float32).reshape(Cout, 1)
    TN, HWp = _lane_tiles(HW)
    if HWp != HW:
        patches = jnp.pad(patches, ((0, 0), (0, 0), (0, HWp - HW)))
    out = pl.pallas_call(
        functools.partial(_conv_kernel, act=act),
        out_shape=jax.ShapeDtypeStruct((B, Cout, HWp), jnp.float32),
        grid=(B, HWp // TN),
        in_specs=[pl.BlockSpec((1, K, TN), lambda bi, j: (bi, 0, j)),
                  pl.BlockSpec((Cout, K), lambda bi, j: (0, 0)),
                  pl.BlockSpec((Cout, 1), lambda bi, j: (0, 0))],
        out_specs=pl.BlockSpec((1, Cout, TN), lambda bi, j: (bi, 0, j)),
        compiler_params=_PAR2,
    )(patches, Wf, bias)
    if HWp != HW:
        out = out[:, :, :HW]
    return out.reshape(B, Cout, H, W_)


# ---------------------------------------------------------------------------
# Modules
# ---------------------------------------------------------------------------
RGB_MEAN = jnp.array([0.4488, 0.4371, 0.4040], jnp.float32)


def mean_shift(x, sign):
    # MeanShift with rgb_std = (1,1,1): identity 1x1 conv + per-channel bias.
    return x + sign * 255.0 * RGB_MEAN.reshape(1, 3, 1, 1)


@jax.jit
def ca_layer(x, p):
    """Channel attention.  Tiny (B x C) matmuls -> plain XLA, not Pallas."""
    B, C, H, W = x.shape
    hdim = p["w1"].shape[0]
    pooled = jnp.mean(x, axis=(2, 3))                               # (B, C)
    w1 = p["w1"].reshape(hdim, C).astype(jnp.float32)
    w2 = p["w2"].reshape(C, hdim).astype(jnp.float32)
    y = jax.nn.relu(pooled @ w1.T + p["b1"])
    y = jax.nn.sigmoid(y @ w2.T + p["b2"])
    return x * y[:, :, None, None]


def spatial_attention(x, w):
    avg = jnp.mean(x, axis=1, keepdims=True)
    mx = jnp.max(x, axis=1, keepdims=True)
    s = jnp.concatenate([avg, mx], axis=1)                          # (B, 2, H, W)
    y = conv2d(s, w, None, act="sigmoid")                           # (B, 1, H, W)
    return y * x


def frdab(x, p):
    res = x
    y1 = conv2d(x, p["c1_w"], p["c1_b"], act="relu")
    y2 = conv2d(y1, p["c2_w"], p["c2_b"], act="relu")
    y3 = conv2d(y1, p["c3_w"], p["c3_b"], act="relu")
    cat1 = jnp.concatenate([y1, y2, y3], axis=1)
    y4 = conv2d(cat1, p["c4_w"], p["c4_b"], act="relu")
    y5 = conv2d(y3, p["c5_w"], p["c5_b"])
    cat2 = jnp.concatenate([y2, y5, y4], axis=1)
    ca_out = ca_layer(cat2, p["se"])
    sa_out = spatial_attention(cat2, p["sa_w"])
    y6 = ca_out + sa_out
    y7 = conv2d(y6, p["c6_w"], p["c6_b"])
    return res + y7


@jax.jit
def lffm(x, p):
    res = x
    out1 = frdab(x, p["b1"])
    dense1 = jnp.concatenate([x, out1], axis=1)
    out2 = frdab(conv2d(dense1, p["c1_w"], p["c1_b"], groups=2), p["b2"])
    dense2 = jnp.concatenate([x, out1, out2], axis=1)
    out3 = frdab(conv2d(dense2, p["c2_w"], p["c2_b"], groups=2), p["b3"])
    dense3 = jnp.concatenate([x, out1, out2, out3], axis=1)
    out4 = conv2d(dense3, p["c3_w"], p["c3_b"])
    return res + out4


@functools.partial(jax.jit, static_argnames=("num_heads",))
def trans_block(x, p, num_heads):
    B, N, C = x.shape
    a = p["atten"]
    m = p["mlp"]
    x2d = x.reshape(B * N, C)
    # --- attention branch: fused LN1 + reduce + qkv projections ---
    qkv = ln_reduce_qkv(x2d, p["norm1_g"], p["norm1_b"],
                        a["reduce_wT"], a["qkv_wT"])                # (B*N, 3C)
    Dh = C // num_heads
    qkv = qkv.reshape(B, N, 3, num_heads, Dh).transpose(2, 0, 3, 1, 4)
    q, k, v = qkv[0], qkv[1], qkv[2]                                # (B, H, N, Dh)
    S = math.ceil(N // 16)                                          # torch: ceil(N // 16)
    assert S >= 1 and N % S == 0, "N must split evenly into chunks for this test"
    nc = N // S
    G = B * num_heads * nc
    o = chunked_attention(q.reshape(G, S, Dh), k.reshape(G, S, Dh),
                          v.reshape(G, S, Dh), scale=Dh ** (-0.5))
    o = o.reshape(B, num_heads, nc, S, Dh).transpose(0, 2, 3, 1, 4).reshape(B * N, C)
    # --- fused epilogue: proj + residual + LN2 + MLP + residual ---
    x2d = attn_proj_mlp(o, x2d, a["proj_wT"], a["proj_b"],
                        p["norm2_g"], p["norm2_b"],
                        m["fc1_wT"], m["fc1_b"], m["fc2_wT"], m["fc2_b"])
    return x2d.reshape(B, N, C)


@functools.partial(jax.jit, static_argnames=("upscale",))
def tail(x, w, b, upscale):
    # TODO(synk): `Upsampler` is referenced but not defined in the reference
    # source; implemented here as conv(n_feat -> num_out_ch*upscale^2, 3) +
    # PixelShuffle(upscale).
    y = conv2d(x, w, b)
    B, Cr, H, W = y.shape
    r = upscale
    C = Cr // (r * r)
    y = y.reshape(B, C, r, r, H, W).transpose(0, 1, 4, 2, 5, 3)
    return y.reshape(B, C, H * r, W * r)


def lbnet_forward(params, x, num_heads=8, upscale=2):
    y_input1 = mean_shift(x, -1.0)
    y_input = conv2d(y_input1, params["head_w"], params["head_b"])
    res = y_input
    y1 = lffm(y_input, params["r1"])
    y2 = lffm(y1, params["r2"])
    y3 = lffm(y2, params["r3"])
    y5 = lffm(y3 + ca_layer(y1, params["se1"]), params["r1"])
    y6 = lffm(y5 + ca_layer(y2, params["se2"]), params["r2"])
    y6_1 = lffm(y6 + ca_layer(y3, params["se3"]), params["r3"])
    y7 = jnp.concatenate([y1, y2, y3, y5, y6, y6_1], axis=1)
    y8 = conv2d(y7, params["c1_w"], params["c1_b"])
    _, _, h, w = y8.shape

    t = unfold_nchw(y8, 3, 1).transpose(0, 2, 1)                # (B, HW, 9*n_feat)
    for _ in range(3):
        t = trans_block(t, params["attention"], num_heads)
    out1 = fold_nchw(t.transpose(0, 2, 1), h, w, 3, 1)

    y9 = conv2d(out1, params["c2_w"], params["c2_b"])
    t2 = unfold_nchw(y9, 3, 1).transpose(0, 2, 1)
    for _ in range(3):
        t2 = trans_block(t2, params["attention2"], num_heads)
    out2 = fold_nchw(t2.transpose(0, 2, 1), h, w, 3, 1)

    y10 = conv2d(out2, params["c3_w"], params["c3_b"])
    output = y10 + res
    output = tail(output, params["tail_w"], params["tail_b"], upscale)
    return mean_shift(output, +1.0)


# ---------------------------------------------------------------------------
# Deterministic parameter construction
# ---------------------------------------------------------------------------
class ParamGen:
    def __init__(self, seed):
        self._key = jax.random.PRNGKey(seed)

    def _next(self):
        self._key, sub = jax.random.split(self._key)
        return sub

    def conv(self, cout, cin, k, bias=True):
        fan_in = cin * k * k
        w = jax.random.normal(self._next(), (cout, cin, k, k), jnp.float32) * (0.5 / math.sqrt(fan_in))
        b = jnp.zeros((cout,), jnp.float32) if bias else None
        return w, b

    def linear(self, cout, cin, bias=True):
        w = jax.random.normal(self._next(), (cout, cin), jnp.float32) * (0.5 / math.sqrt(cin))
        b = jnp.zeros((cout,), jnp.float32) if bias else None
        return w, b


def make_ca_params(pg, C, r=16):
    w1, b1 = pg.conv(C // r, C, 1)
    w2, b2 = pg.conv(C, C // r, 1)
    return {"w1": w1, "b1": b1, "w2": w2, "b2": b2}


def make_frdab_params(pg, n):
    p = {}
    p["c1_w"], p["c1_b"] = pg.conv(n, n, 1)
    p["c2_w"], p["c2_b"] = pg.conv(n // 2, n, 3)
    p["c3_w"], p["c3_b"] = pg.conv(n // 2, n, 3)
    p["c4_w"], p["c4_b"] = pg.conv(n, 2 * n, 3)
    p["c5_w"], p["c5_b"] = pg.conv(n // 2, n // 2, 3)
    p["c6_w"], p["c6_b"] = pg.conv(n, 2 * n, 1)
    p["se"] = make_ca_params(pg, 2 * n, 16)
    p["sa_w"] = pg.conv(1, 2, 7, bias=False)[0]
    return p


def make_lffm_params(pg, n):
    p = {"b1": make_frdab_params(pg, n),
         "b2": make_frdab_params(pg, n),
         "b3": make_frdab_params(pg, n)}
    p["c1_w"], p["c1_b"] = pg.conv(n, n, 1)             # Conv2d(2n, n, 1, groups=2)
    p["c2_w"], p["c2_b"] = pg.conv(n, 3 * n // 2, 1)    # Conv2d(3n, n, 1, groups=2)
    p["c3_w"], p["c3_b"] = pg.conv(n, 4 * n, 1)         # Conv2d(4n, n, 1)
    return p


def make_transblock_params(pg, dim):
    red_w, _ = pg.linear(dim, dim, bias=False)
    qkv_w, _ = pg.linear(3 * dim, dim, bias=False)
    proj_w, proj_b = pg.linear(dim, dim, bias=True)
    fc1_w, fc1_b = pg.linear(dim // 4, dim)
    fc2_w, fc2_b = pg.linear(dim, dim // 4)
    return {
        "atten": {"reduce_w": red_w, "qkv_w": qkv_w, "proj_w": proj_w, "proj_b": proj_b},
        "norm1_g": jnp.ones((dim,), jnp.float32), "norm1_b": jnp.zeros((dim,), jnp.float32),
        "norm2_g": jnp.ones((dim,), jnp.float32), "norm2_b": jnp.zeros((dim,), jnp.float32),
        "mlp": {"fc1_w": fc1_w, "fc1_b": fc1_b, "fc2_w": fc2_w, "fc2_b": fc2_b},
    }


def make_lbnet_params(seed, upscale=2, num_in_ch=3, num_out_ch=3, n_feat=32):
    pg = ParamGen(seed)
    p = {}
    p["head_w"], p["head_b"] = pg.conv(n_feat, num_in_ch, 3)
    p["r1"] = make_lffm_params(pg, n_feat)
    p["r2"] = make_lffm_params(pg, n_feat)
    p["r3"] = make_lffm_params(pg, n_feat)
    p["se1"] = make_ca_params(pg, n_feat, 16)
    p["se2"] = make_ca_params(pg, n_feat, 16)
    p["se3"] = make_ca_params(pg, n_feat, 16)
    p["attention"] = make_transblock_params(pg, n_feat * 9)
    p["attention2"] = make_transblock_params(pg, n_feat * 9)
    p["c1_w"], p["c1_b"] = pg.conv(n_feat, 6 * n_feat, 1)
    p["c2_w"], p["c2_b"] = pg.conv(n_feat, n_feat, 3)
    p["c3_w"], p["c3_b"] = pg.conv(n_feat, n_feat, 3)
    p["tail_w"], p["tail_b"] = pg.conv(num_out_ch * upscale * upscale, n_feat, 3)
    return p


def prepare_params(params):
    """Pre-cast every >=2-D weight to bfloat16 once (MXU-native operands),
    keep biases / LayerNorm affine in float32, and pre-transpose the
    transformer linear weights so the hot path never pays for `.T`."""
    def cast(a):
        return a.astype(jnp.bfloat16) if a.ndim >= 2 else a.astype(jnp.float32)
    p = jax.tree_util.tree_map(cast, params)
    for name in ("attention", "attention2"):
        tb = p[name]
        a, m = tb["atten"], tb["mlp"]
        a["reduce_wT"] = a["reduce_w"].T
        a["qkv_wT"] = a["qkv_w"].T
        a["proj_wT"] = a["proj_w"].T
        m["fc1_wT"] = m["fc1_w"].T
        m["fc2_wT"] = m["fc2_w"].T
        del a["reduce_w"], a["qkv_w"], a["proj_w"], m["fc1_w"], m["fc2_w"]
    return p


if __name__ == "__main__":
    upscale = 2
    B, C, H, W = 2, 3, 8, 8       # small test shape; N = H*W = 64 -> chunk size 4
    x = jax.random.uniform(jax.random.PRNGKey(0), (B, C, H, W),
                           minval=0.0, maxval=255.0, dtype=jnp.float32)
    params = prepare_params(
        make_lbnet_params(seed=42, upscale=upscale, num_in_ch=3, num_out_ch=3, n_feat=32))

    y = lbnet_forward(params, x, num_heads=8, upscale=upscale)
    y = jax.block_until_ready(y)
    assert y.shape == (B, 3, H * upscale, W * upscale), y.shape
    assert bool(jnp.all(jnp.isfinite(y)))
    print("KERNEL_OK")
</pallas_src>

<mosaic_0001>
module attributes {stable_mosaic.version = 11 : i64} {
  func.func @_conv_kernel(%arg0: i32, %arg1: i32, %arg2: memref<1x27x64xbf16, #tpu.memory_space<vmem>>, %arg3: memref<32x27xbf16, #tpu.memory_space<vmem>>, %arg4: memref<32x1xf32, #tpu.memory_space<vmem>>, %arg5: memref<1x32x64xf32, #tpu.memory_space<vmem>>) attributes {dimension_semantics = [#tpu.dimension_semantics<parallel>, #tpu.dimension_semantics<parallel>], iteration_bounds = array<i64: 2, 1>, scalar_prefetch = 0 : i64, scratch_operands = 0 : i64, tpu.core_type = #tpu.core_type<tc>, window_params = [{transform_indices = @transform_0, window_bounds = array<i64: 1, 27, 64>}, {pipeline_mode = #tpu.pipeline_mode<synchronous>, transform_indices = @transform_1, window_bounds = array<i64: 32, 27>}, {pipeline_mode = #tpu.pipeline_mode<synchronous>, transform_indices = @transform_2, window_bounds = array<i64: 32, 1>}, {transform_indices = @transform_3, window_bounds = array<i64: 1, 32, 64>}]} {
    %c0 = arith.constant 0 : index
    %c0_0 = arith.constant 0 : index
    %c0_1 = arith.constant 0 : index
    %0 = vector.load %arg2[%c0, %c0_0, %c0_1] : memref<1x27x64xbf16, #tpu.memory_space<vmem>>, vector<1x27x64xbf16>
    %1 = vector.shape_cast %0 : vector<1x27x64xbf16> to vector<27x64xbf16>
    %c0_2 = arith.constant 0 : index
    %c0_3 = arith.constant 0 : index
    %2 = vector.load %arg3[%c0_2, %c0_3] : memref<32x27xbf16, #tpu.memory_space<vmem>>, vector<32x27xbf16>
    %cst = arith.constant dense<0.000000e+00> : vector<32x64xf32>
    %3 = tpu.matmul %2, %1, %cst {dimension_numbers = #tpu.dot_dimension_numbers<[1], [0], [0], [1], [0, 0, 1, 1], [], []>} : vector<32x27xbf16>, vector<27x64xbf16>, vector<32x64xf32> -> vector<32x64xf32>
    %c0_4 = arith.constant 0 : index
    %c0_5 = arith.constant 0 : index
    %4 = vector.load %arg4[%c0_4, %c0_5] : memref<32x1xf32, #tpu.memory_space<vmem>>, vector<32x1xf32>
    %5 = vector.broadcast %4 : vector<32x1xf32> to vector<32x64xf32>
    %6 = arith.addf %3, %5 : vector<32x64xf32>
    %c0_6 = arith.constant 0 : index
    %c0_7 = arith.constant 0 : index
    %c0_8 = arith.constant 0 : index
    %7 = vector.load %arg5[%c0_6, %c0_7, %c0_8] : memref<1x32x64xf32, #tpu.memory_space<vmem>>, vector<1x32x64xf32>
    %8 = vector.shape_cast %7 : vector<1x32x64xf32> to vector<32x64xf32>
    %9 = vector.shape_cast %6 : vector<32x64xf32> to vector<1x32x64xf32>
    tpu.vector_store %arg5[%c0_6, %c0_7, %c0_8], %9 {strides = array<i32>} : memref<1x32x64xf32, #tpu.memory_space<vmem>>, vector<1x32x64xf32>,
    return
  }
  func.func @transform_0(%arg0: i32, %arg1: i32) -> (i32, i32, i32) {
    %c0_i32 = arith.constant 0 : i32
    %c0_i32_0 = arith.constant 0 : i32
    return %arg0, %c0_i32, %arg1 : i32, i32, i32
  }
  func.func @transform_1(%arg0: i32, %arg1: i32) -> (i32, i32) {
    %c0_i32 = arith.constant 0 : i32
    %c0_i32_0 = arith.constant 0 : i32
    %c0_i32_1 = arith.constant 0 : i32
    return %c0_i32, %c0_i32_0 : i32, i32
  }
  func.func @transform_2(%arg0: i32, %arg1: i32) -> (i32, i32) {
    %c0_i32 = arith.constant 0 : i32
    %c0_i32_0 = arith.constant 0 : i32
    %c0_i32_1 = arith.constant 0 : i32
    return %c0_i32, %c0_i32_0 : i32, i32
  }
  func.func @transform_3(%arg0: i32, %arg1: i32) -> (i32, i32, i32) {
    %c0_i32 = arith.constant 0 : i32
    %c0_i32_0 = arith.constant 0 : i32
    return %arg0, %c0_i32, %arg1 : i32, i32, i32
  }
}

</mosaic_0001>

<llo_original>
// kernel: conv2d.1
$region0: #{conv2d.1}
  #allocation0 [shape = 'u32[]', space=smem, size = 0x4, offset = 0x4, fixed_abs, tag = 'smem constant byte address 0x4 - core index']
  #allocation1 [shape = 'u32[144,128]{1,0:T(1,128)}', space=vmem, size = 0x12000, scoped, tag = 'internal scratch']
  %s0 = inlined_call_operand.vmem [shape: bf16[2,27,64], index: 0, kind: input, shape index: {}]
  %s1 = inlined_call_operand.vmem [shape: bf16[32,27], index: 1, kind: input, shape index: {}]
  %s2 = inlined_call_operand.vmem [shape: f32[32,1], index: 2, kind: input, shape index: {}]
  %s3 = inlined_call_operand.vmem [shape: f32[2,32,64], index: 3, kind: output, shape index: {}]
  %s4 = sld [smem:[#allocation0]]
  $region45: #{conv2d.1} parent=0
    _
  %s6 = ssub.s32 1, %s4
  %s7 = scalar_select 0, %s6, %s4
  loop: start=0, step=1, limit=4
  $region2: #{conv2d.1} parent=0 // loop_pre_header
    _
  $region3: #{conv2d.1} parent=0 // loop_header
    %s9 = sphi 0, %s13
    %p10 = scmp.ge.s32.totalorder %s9, 4
    %s16 = sphi 0, %s28
    %s17 = sphi 0, %s24
    %s18 = sphi 0, %s16
    %s19 = sphi 0, %s17
    %s20 = sphi 0, %s18
    %s21 = sphi 0, %s19
    %s33 = sphi 0, %s35
    %s36 = sphi 0, %s33
    %s37 = sphi 0, %s36
    %s53 = sphi 0, %s37
    %s57 = sphi 0, %s57
    %s59 = sphi 0, %s57
    %s60 = sphi 0, %s59
    %s74 = sphi 0, %s60
    %s78 = sphi 0, %s78
    %s80 = sphi 0, %s78
    %s81 = sphi 0, %s80
    %s95 = sphi 0, %s81
    %s103 = sphi 0, %s105
    %s106 = sphi 0, %s103
    %s107 = sphi 0, %s106
    %s123 = sphi 0, %s107
  $region4: #{conv2d.1} parent=0 // loop_header_branch
    %12 = sbr.rel (%p10) target = $region8
  $region5: #{conv2d.1} parent=0 // loop_body
    %s14 = ssub.s32 %s9, 1
    %s15 = ssub.s32 %s9, 2
    %s22 = sadd.s32 1, %s17
    %p23 = scmp.ge.s32.totalorder %s22, 1
    %s24 = scalar_select %p23, 0, %s22
    %s25 = sadd.s32 1, %s16
    %s26 = scalar_select %p23, %s25, %s16
    %p27 = scmp.ge.s32.totalorder %s26, 2
    %s28 = scalar_select %p27, 0, %s26
    %s29 = ssub.s32 %s16, %s28
    %s30 = ssub.s32 %s17, %s24
    %s31 = sor.u32 %s29, %s30
    %p32 = scmp.eq.s32.totalorder %s31, 0
    %s34 = sadd.s32 %s33, 1
    %s35 = scalar_select %p32, %s33, %s34
    %p38 = pneg %p32
    %p39 = scmp.eq.s32.totalorder %s9, 1
    %p40 = por %p38, %p39
    %p41 = scmp.ne.s32.totalorder %s33, %s36
    %p42 = scmp.eq.s32.totalorder %s9, 0
    %p43 = por %p41, %p42
    %p44 = scmp.ne.s32.totalorder %s33, %s36
    %p45 = scmp.eq.s32.totalorder %s14, 1
    %p46 = por %p44, %p45
    %p47 = scmp.ne.s32.totalorder %s36, %s37
    %p48 = scmp.eq.s32.totalorder %s14, 0
    %p49 = por %p47, %p48
    %p50 = scmp.ne.s32.totalorder %s36, %s37
    %p51 = scmp.eq.s32.totalorder %s15, 1
    %p52 = por %p50, %p51
    %p54 = scmp.ne.s32.totalorder %s37, %s53
    %p55 = scmp.eq.s32.totalorder %s15, 0
    %p56 = por %p54, %p55
    %s58 = sadd.s32 %s57, 1
    %p61 = scmp.eq.s32.totalorder %s9, 1
    %p62 = scmp.ne.s32.totalorder %s57, %s59
    %p63 = scmp.eq.s32.totalorder %s9, 0
    %p64 = por %p62, %p63
    %p65 = scmp.ne.s32.totalorder %s57, %s59
    %p66 = scmp.eq.s32.totalorder %s14, 1
    %p67 = por %p65, %p66
    %p68 = scmp.ne.s32.totalorder %s59, %s60
    %p69 = scmp.eq.s32.totalorder %s14, 0
    %p70 = por %p68, %p69
    %p71 = scmp.ne.s32.totalorder %s59, %s60
    %p72 = scmp.eq.s32.totalorder %s15, 1
    %p73 = por %p71, %p72
    %p75 = scmp.ne.s32.totalorder %s60, %s74
    %p76 = scmp.eq.s32.totalorder %s15, 0
    %p77 = por %p75, %p76
    %s79 = sadd.s32 %s78, 1
    %p82 = scmp.eq.s32.totalorder %s9, 1
    %p83 = scmp.ne.s32.totalorder %s78, %s80
    %p84 = scmp.eq.s32.totalorder %s9, 0
    %p85 = por %p83, %p84
    %p86 = scmp.ne.s32.totalorder %s78, %s80
    %p87 = scmp.eq.s32.totalorder %s14, 1
    %p88 = por %p86, %p87
    %p89 = scmp.ne.s32.totalorder %s80, %s81
    %p90 = scmp.eq.s32.totalorder %s14, 0
    %p91 = por %p89, %p90
    %p92 = scmp.ne.s32.totalorder %s80, %s81
    %p93 = scmp.eq.s32.totalorder %s15, 1
    %p94 = por %p92, %p93
    %p96 = scmp.ne.s32.totalorder %s81, %s95
    %p97 = scmp.eq.s32.totalorder %s15, 0
    %p98 = por %p96, %p97
    %s99 = ssub.s32 %s16, %s28
    %s100 = ssub.s32 %s17, %s24
    %s101 = sor.u32 %s99, %s100
    %p102 = scmp.eq.s32.totalorder %s101, 0
    %s104 = sadd.s32 %s103, 1
    %s105 = scalar_select %p102, %s103, %s104
    %p108 = pneg %p102
    %p109 = scmp.eq.s32.totalorder %s9, 1
    %p110 = por %p108, %p109
    %p111 = scmp.ne.s32.totalorder %s103, %s106
    %p112 = scmp.eq.s32.totalorder %s9, 0
    %p113 = por %p111, %p112
    %p114 = scmp.ne.s32.totalorder %s103, %s106
    %p115 = scmp.eq.s32.totalorder %s14, 1
    %p116 = por %p114, %p115
    %p117 = scmp.ne.s32.totalorder %s106, %s107
    %p118 = scmp.eq.s32.totalorder %s14, 0
    %p119 = por %p117, %p118
    %p120 = scmp.ne.s32.totalorder %s106, %s107
    %p121 = scmp.eq.s32.totalorder %s15, 1
    %p122 = por %p120, %p121
    %p124 = scmp.ne.s32.totalorder %s107, %s123
    %p125 = scmp.eq.s32.totalorder %s15, 0
    %p126 = por %p124, %p125
    %p127 = scmp.le.s32.totalorder 1, %s9
    %p128 = scmp.lt.s32.totalorder %s9, 3
    %p129 = pnand %p127, %p128
    %p130 = pneg %p129
    // Predicated region
    $region9: #{conv2d.1} parent=5 // pred_check
      _
    $region10: #{conv2d.1} parent=5 // pred_check_branch
      %132 = sbr.rel (%p129) target = $region12
    $region11: #{conv2d.1} parent=5 // pred_region
      %s133 = ssub.s32 %s9, 1
      // Predicated region
      $region13: #{conv2d.1} parent=11 // pred_check
        %p134 = pneg %p70
      $region14: #{conv2d.1} parent=11 // pred_check_branch
        %136 = sbr.rel (%p134) target = $region16
      $region15: #{conv2d.1} parent=11 // pred_region
        _
      $region16: #{conv2d.1} parent=11 // pred_fallthru
        _
      // Predicated region
      $region17: #{conv2d.1} parent=11 // pred_check
        %p137 = pneg %p91
      $region18: #{conv2d.1} parent=11 // pred_check_branch
        %139 = sbr.rel (%p137) target = $region20
      $region19: #{conv2d.1} parent=11 // pred_region
        _
      $region20: #{conv2d.1} parent=11 // pred_fallthru
        _
    $region12: #{conv2d.1} parent=5 // pred_fallthru
      _
    %p140 = scmp.lt.s32.totalorder %s9, 2
    // Predicated region
    $region21: #{conv2d.1} parent=5 // pred_check
      %p141 = pneg %p140
    $region22: #{conv2d.1} parent=5 // pred_check_branch
      %143 = sbr.rel (%p141) target = $region24
    $region23: #{conv2d.1} parent=5 // pred_region
      // Predicated region
      $region25: #{conv2d.1} parent=23 // pred_check
        %p144 = pneg %p43
      $region26: #{conv2d.1} parent=23 // pred_check_branch
        %146 = sbr.rel (%p144) target = $region28
      $region27: #{conv2d.1} parent=23 // pred_region
        %p147 = scmp.lt.s32.totalorder %s16, 1
        %s148 = scalar_select %p147, %s16, 1
        %p149 = scmp.lt.s32.totalorder %s17, 0
        %s150 = scalar_select %p149, %s17, 0
        %s151 = smul.addr %s148, 4
        %s152 = sadd.s32 %s150, %s151
        %s153 = smul.addr %s152, 4
        %s154 = scalar_lea.vmem %s0, %s153
      $region28: #{conv2d.1} parent=23 // pred_fallthru
        _
    $region24: #{conv2d.1} parent=5 // pred_fallthru
      _
    %p155 = scmp.le.s32.totalorder 1, %s9
    %p156 = scmp.lt.s32.totalorder %s9, 3
    %p157 = pnand %p155, %p156
    %p158 = pneg %p157
    // Predicated region
    $region29: #{conv2d.1} parent=5 // pred_check
      _
    $region30: #{conv2d.1} parent=5 // pred_check_branch
      %160 = sbr.rel (%p157) target = $region32
    $region31: #{conv2d.1} parent=5 // pred_region
      %s161 = ssub.s32 %s9, 1
      %p162 = scmp.lt.s32.totalorder %s18, 1
      %s163 = scalar_select %p162, %s18, 1
      %p164 = scmp.lt.s32.totalorder %s19, 0
      %s165 = scalar_select %p164, %s19, 0
      %s166 = smul.addr %s163, 4
      %s167 = sadd.s32 %s165, %s166
      %s168 = smul.addr %s167, 4
      %s169 = scalar_lea.vmem %s0, %s168
      %p170 = pneg %p49
      %p171 = pneg %p46
      %p172 = pneg %p70
      %p173 = pneg %p67
      %p174 = pneg %p91
      %p175 = pneg %p88
      %p176 = pneg %p119
      %p177 = pneg %p116
      %p178 = scmp.lt.s32.totalorder %s18, 1
      %s179 = scalar_select %p178, %s18, 1
      %p180 = scmp.lt.s32.totalorder %s19, 0
      %s181 = scalar_select %p180, %s19, 0
      %s182 = smul.addr %s179, 4
      %s183 = sadd.s32 %s181, %s182
      %s184 = smul.addr %s183, 8
      %s185 = scalar_lea.vmem %s3, %s184
      %p186 = scmp.lt.s32.totalorder %s18, 1
      %s187 = scalar_select %p186, %s18, 1
      %p188 = scmp.lt.s32.totalorder %s19, 0
      %s189 = scalar_select %p188, %s19, 0
      %s190 = smul.addr %s187, 4
      %s191 = sadd.s32 %s189, %s190
      %s192 = smul.addr %s191, 4
      %s193 = scalar_lea.vmem %s0, %s192
      %p194 = scmp.lt.s32.totalorder %s18, 1
      %s195 = scalar_select %p194, %s18, 1
      %p196 = scmp.lt.s32.totalorder %s19, 0
      %s197 = scalar_select %p196, %s19, 0
      %s198 = smul.addr %s195, 4
      %s199 = sadd.s32 %s197, %s198
      %s200 = smul.addr %s199, 8
      %s201 = scalar_lea.vmem %s3, %s200
      %v203 = vld [vmem:[%s193] sm:$0xf]
      %v204 = vld [vmem:[%s193 + $0x4] sm:$0xf]
      %v205 = vld [vmem:[%s193 + $0x8] sm:$0xf]
      %v206 = vld [vmem:[%s193 + $0xc] sm:$0x3]
      %v207 = vld [vmem:[%s1] sm:$0xf]
      %v208 = vld [vmem:[%s1 + $0x4] sm:$0xf]
      %v209 = vld [vmem:[%s1 + $0x8] sm:$0xf]
      %v210 = vld [vmem:[%s1 + $0xc] sm:$0xf]
      %v211 = vld [vmem:[%s2] sm:$0xff]
      %v212 = vld [vmem:[%s2 + $0x8] sm:$0xff]
      %v213 = vld [vmem:[%s2 + $0x10] sm:$0xff]
      %v214 = vld [vmem:[%s2 + $0x18] sm:$0xff]
      %216 = vset.pattern.permute.xlu0 0
      %217 = vperm.xlu0 %216, %v211
      %v218 = vpop.permute.xlu0 %217
      %221 = vset.pattern.permute.xlu0 0
      %222 = vperm.xlu0 %221, %v212
      %v223 = vpop.permute.xlu0 %222
      %226 = vset.pattern.permute.xlu0 0
      %227 = vperm.xlu0 %226, %v213
      %v228 = vpop.permute.xlu0 %227
      %231 = vset.pattern.permute.xlu0 0
      %232 = vperm.xlu0 %231, %v214
      %v233 = vpop.permute.xlu0 %232
      %v239 = vunpack.c.l.b16 %v207
      %v240 = vunpack.c.l.b16 %v208
      %v241 = vunpack.c.l.b16 %v209
      %v242 = vunpack.c.l.b16 %v210
      %v243 = vpack.c.b16 %v240, %v239
      %v244 = vpack.c.b16 %v242, %v241
      %v249 = vunpack.c.l.b16 %v203
      %v250 = vunpack.c.l.b16 %v204
      %v251 = vunpack.c.l.b16 %v205
      %v252 = vunpack.c.l.b16 %v206
      %v253 = vpack.c.b16 %v250, %v249
      %v254 = vpack.c.b16 %v252, %v251
      %vm256 = vcmask 220160
      %v258 = vsel %vm256, %v243, 0
      %v261 = vsel %vm256, %v244, 0
      %vm263 = vcmask 1044480
      %vm264 = vcmask 1045504
      %v265 = vsel %vm263, 4294967295, 65535
      %v266 = vsel %vm264, %v265, 0
      %v268 = vand.u32 %v254, %v266
      %270 = vmatprep.subr.bf16.mxu0 0
      %271 = vmatpush1.bf16.msra.mxu0 %v253
      %272 = vmatprep.subr.bf16.mxu0 0
      %273 = vmatpush1.bf16.msra.mxu0 %v268
      %274 = vmatprep.subr.bf16.mxu0 0
      %275 = vmatpush1.bf16.msra.mxu0 0
      %276 = vmatprep.subr.bf16.mxu0 0
      %277 = vmatpush1.bf16.msra.mxu0 0
      %278 = vmatprep.subr.bf16.mxu0 0
      %279 = vmatpush1.bf16.msra.mxu0 0
      %280 = vmatprep.subr.bf16.mxu0 0
      %281 = vmatpush1.bf16.msra.mxu0 0
      %282 = vmatprep.subr.bf16.mxu0 0
      %283 = vmatpush1.bf16.msra.mxu0 0
      %284 = vmatprep.subr.bf16.mxu0 0
      %285 = vmatpush1.bf16.msra.mxu0 0
      %286 = vmatprep.subr.bf16.mxu0 0
      %287 = vmatpush1.bf16.msra.mxu0 0
      %288 = vmatprep.subr.bf16.mxu0 0
      %289 = vmatpush1.bf16.msra.mxu0 0
      %290 = vmatprep.subr.bf16.mxu0 0
      %291 = vmatpush1.bf16.msra.mxu0 0
      %292 = vmatprep.subr.bf16.mxu0 0
      %293 = vmatpush1.bf16.msra.mxu0 0
      %294 = vmatprep.subr.bf16.mxu0 0
      %295 = vmatpush1.bf16.msra.mxu0 0
      %296 = vmatprep.subr.bf16.mxu0 0
      %297 = vmatpush1.bf16.msra.mxu0 0
      %298 = vmatprep.subr.bf16.mxu0 0
      %299 = vmatpush1.bf16.msra.mxu0 0
      %300 = vmatprep.subr.bf16.mxu0 0
      %301 = vmatpush1.bf16.msra.mxu0 0
      %302 = vmatprep.mubr.bf16.mxu0 0
      %303 = vmatmul.mubr.bf16.gmra.mrb[0].mxu0 %v258
      %v304 = vpop.f32.mrb[0].mxu0
      %v305 = vadd.f32 %v218, %v304
      %v306 = vpop.f32.mrb[0].mxu0
      %v307 = vpop.f32.mrb[0].mxu0
      %v308 = vadd.f32 %v223, %v307
      %v309 = vpop.f32.mrb[0].mxu0
      %310 = vmatprep.mubr.bf16.mxu0 0
      %311 = vmatmul.mubr.bf16.gmra.mrb[0].mxu0 %v261
      %v312 = vpop.f32.mrb[0].mxu0
      %v313 = vadd.f32 %v228, %v312
      %v314 = vpop.f32.mrb[0].mxu0
      %v315 = vpop.f32.mrb[0].mxu0
      %v316 = vadd.f32 %v233, %v315
      %v317 = vpop.f32.mrb[0].mxu0
      %318 = vdwg.mxu0
      %vm319 = vcmask 523264
      %320 = vst.msk [vmem:[%s201] sm:$0xff] %vm319, %v305
      %321 = vst.msk [vmem:[%s201 + $0x8] sm:$0xff] %vm319, %v308
      %322 = vst.msk [vmem:[%s201 + $0x10] sm:$0xff] %vm319, %v313
      %323 = vst.msk [vmem:[%s201 + $0x18] sm:$0xff] %vm319, %v316
      %p324 = scmp.lt.s32.totalorder %s18, 1
      %s325 = scalar_select %p324, %s18, 1
      %p326 = scmp.lt.s32.totalorder %s19, 0
      %s327 = scalar_select %p326, %s19, 0
      %s328 = smul.addr %s325, 4
      %s329 = sadd.s32 %s327, %s328
      %s330 = smul.addr %s329, 8
      %s331 = scalar_lea.vmem %s3, %s330
      // Predicated region
      $region33: #{conv2d.1} parent=31 // pred_check
        %p332 = pneg %p116
      $region34: #{conv2d.1} parent=31 // pred_check_branch
        %334 = sbr.rel (%p332) target = $region36
      $region35: #{conv2d.1} parent=31 // pred_region
        _
      $region36: #{conv2d.1} parent=31 // pred_fallthru
        _
    $region32: #{conv2d.1} parent=5 // pred_fallthru
      _
    %p335 = scmp.le.s32.totalorder 2, %s9
    // Predicated region
    $region37: #{conv2d.1} parent=5 // pred_check
      %p336 = pneg %p335
    $region38: #{conv2d.1} parent=5 // pred_check_branch
      %338 = sbr.rel (%p336) target = $region40
    $region39: #{conv2d.1} parent=5 // pred_region
      %s339 = ssub.s32 %s9, 2
      // Predicated region
      $region41: #{conv2d.1} parent=39 // pred_check
        %p340 = pneg %p122
      $region42: #{conv2d.1} parent=39 // pred_check_branch
        %342 = sbr.rel (%p340) target = $region44
      $region43: #{conv2d.1} parent=39 // pred_region
        %p343 = scmp.lt.s32.totalorder %s20, 1
        %s344 = scalar_select %p343, %s20, 1
        %p345 = scmp.lt.s32.totalorder %s21, 0
        %s346 = scalar_select %p345, %s21, 0
        %s347 = smul.addr %s344, 4
        %s348 = sadd.s32 %s346, %s347
        %s349 = smul.addr %s348, 8
        %s350 = scalar_lea.vmem %s3, %s349
      $region44: #{conv2d.1} parent=39 // pred_fallthru
        _
    $region40: #{conv2d.1} parent=5 // pred_fallthru
      _
  $region6: #{conv2d.1} parent=0 // loop_footer
    %s13 = sadd.s32 1, %s9
  $region7: #{conv2d.1} parent=0 // loop_footer_branch
    %8 = sbr.rel target = $region3
  $region8: #{conv2d.1} parent=0 // loop_exit
    _

</llo_original>
